<compile_context>
chip_gen: v7x
topology: tpu7x:2x2x1
jax: 0.10.0
libtpu: 0.0.40
codegen_flags: <defaults>
</compile_context>

<pallas_src>
import jax
import jax.numpy as jnp
from jax.experimental import pallas as pl
from jax.experimental.pallas import tpu as pltpu


def _round_up(x, m):
    return (x + m - 1) // m * m


def _rff_mlp_kernel(std_ref, freq_ref,
                    w1s_ref, w1c_ref, b1_ref,
                    w2_ref, b2_ref,
                    w3_ref, b3_ref,
                    o_ref):
    # std_ref: [TB, 1], freq_ref: [1, 32] (2*pi already folded in by wrapper).
    table = std_ref[...] * freq_ref[...]          # [TB, 32] via broadcast (VPU)
    s = jnp.sin(table)                            # EUP
    c = jnp.cos(table)                            # EUP

    # Layer 1 (64 -> 128), concat-free: emb @ W1 == sin@W1[:32] + cos@W1[32:]
    h1 = (jnp.dot(s, w1s_ref[...], preferred_element_type=jnp.float32)
          + jnp.dot(c, w1c_ref[...], preferred_element_type=jnp.float32)
          + b1_ref[...])
    h1 = jnp.maximum(h1, 0.0)

    # Layer 2 (128 -> 256)
    h2 = jnp.dot(h1, w2_ref[...], preferred_element_type=jnp.float32) + b2_ref[...]
    h2 = jnp.maximum(h2, 0.0)

    # Layer 3 (256 -> 512)
    h3 = jnp.dot(h2, w3_ref[...], preferred_element_type=jnp.float32) + b3_ref[...]
    o_ref[...] = jnp.maximum(h3, 0.0)
    # TODO(synk): opt-in bf16-weight path (bf16 operands, f32 accumulation) for
    # v5e where the multi-pass f32 MXU path dominates layer 3; not enabled here
    # because it would loosen the 1e-4 match against the f32 reference.


# Per-tile VMEM at TB=1024 is ~TB*(64+128+256+512+512)*4 B of activations plus
# ~0.7 MiB of resident weights (double-buffered std/out tiles included) — a few
# MiB total, far under the 32 MiB scoped / 64 MiB (v7x) physical VMEM.  The cap
# is therefore chosen for pipelining granularity, not VMEM pressure.
_TB_CAP = 1024


def _choose_tb(B):
    """Batch-tile size: multiple of 8 sublanes; even grid with >= 4 steps when
    the batch allows it (double-buffer overlap + balanced v7x megacore); capped
    so very large batches still get long-M MXU tiles with small per-step
    overhead."""
    if B <= 32:
        return _round_up(B, 8)                              # tiny batch: 1 step
    steps = max(4, 2 * pl.cdiv(pl.cdiv(B, _TB_CAP), 2))     # even, >= 4
    return min(_round_up(pl.cdiv(B, steps), 8), _TB_CAP)


def rff_mlp_block(std_step, params):
    """std_step: [B, 1] float32 -> [B, 512] float32 (matches the PyTorch module)."""
    B = std_step.shape[0]
    freq, (w1, b1), (w2, b2), (w3, b3) = params

    # One-time preprocessing on the XLA side (outside the grid loop):
    freq_scaled = (2.0 * jnp.pi) * freq           # fold 2*pi into the RFF table
    w1_sin = w1[:32, :]                           # split W1 -> no in-kernel concat
    w1_cos = w1[32:, :]

    TB = _choose_tb(B)
    grid = (pl.cdiv(B, TB),)                      # partial last block is masked

    in_specs = [
        pl.BlockSpec((TB, 1), lambda i: (i, 0)),       # std: tiled over batch
        pl.BlockSpec((1, 32), lambda i: (0, 0)),       # freq    (resident)
        pl.BlockSpec((32, 128), lambda i: (0, 0)),     # W1_sin  (resident)
        pl.BlockSpec((32, 128), lambda i: (0, 0)),     # W1_cos  (resident)
        pl.BlockSpec((1, 128), lambda i: (0, 0)),      # b1      (resident)
        pl.BlockSpec((128, 256), lambda i: (0, 0)),    # W2      (resident)
        pl.BlockSpec((1, 256), lambda i: (0, 0)),      # b2      (resident)
        pl.BlockSpec((256, 512), lambda i: (0, 0)),    # W3      (resident)
        pl.BlockSpec((1, 512), lambda i: (0, 0)),      # b3      (resident)
    ]
    out_spec = pl.BlockSpec((TB, 512), lambda i: (i, 0))

    return pl.pallas_call(
        _rff_mlp_kernel,
        out_shape=jax.ShapeDtypeStruct((B, 512), jnp.float32),
        grid=grid,
        in_specs=in_specs,
        out_specs=out_spec,
        compiler_params=pltpu.CompilerParams(
            dimension_semantics=("parallel",)),    # shard batch across TCs (v7x)
    )(std_step, freq_scaled, w1_sin, w1_cos, b1, w2, b2, w3, b3)


def init_params(key):
    """Deterministic parameter init matching the PyTorch module's shapes."""
    k_freq, k1, k2, k3, kb1, kb2, kb3 = jax.random.split(key, 7)
    # RFF_freq = 16 * randn([1, 32])
    freq = 16.0 * jax.random.normal(k_freq, (1, 32), dtype=jnp.float32)

    def linear(kw, kb, fan_in, fan_out):
        # nn.Linear default init: U(-1/sqrt(fan_in), 1/sqrt(fan_in)).
        bound = 1.0 / jnp.sqrt(fan_in)
        # store W transposed: [fan_in, fan_out] so y = x @ W + b
        w = jax.random.uniform(kw, (fan_in, fan_out), jnp.float32, -bound, bound)
        b = jax.random.uniform(kb, (1, fan_out), jnp.float32, -bound, bound)
        return w, b

    l1 = linear(k1, kb1, 64, 128)
    l2 = linear(k2, kb2, 128, 256)
    l3 = linear(k3, kb3, 256, 512)
    return freq, l1, l2, l3


def reference(std_step, params):
    """Pure-JAX reference mirroring the PyTorch forward exactly."""
    freq, (w1, b1), (w2, b2), (w3, b3) = params
    table = 2.0 * jnp.pi * std_step * freq
    x = jnp.concatenate([jnp.sin(table), jnp.cos(table)], axis=1)
    x = jax.nn.relu(x @ w1 + b1)
    x = jax.nn.relu(x @ w2 + b2)
    x = jax.nn.relu(x @ w3 + b3)
    return x


if __name__ == "__main__":
    key = jax.random.PRNGKey(0)
    k_params, k_small, k_big = jax.random.split(key, 3)
    params = init_params(k_params)

    # Small case matching the module's documented interface: [B, 1] -> [B, 512].
    # Exercises a single partial (masked) block.
    B = 2
    std_small = jax.random.uniform(k_small, (B, 1), dtype=jnp.float32)
    out_small = jax.block_until_ready(rff_mlp_block(std_small, params))
    ref_small = reference(std_small, params)
    assert out_small.shape == (B, 512) and out_small.dtype == jnp.float32
    assert jnp.allclose(out_small, ref_small, atol=1e-4, rtol=1e-4), \
        "small-batch mismatch vs reference"

    # Larger, non-multiple batch: exercises the multi-step pipelined grid
    # (even length, >= 4 steps) and the masked partial trailing block.
    B2 = 600
    std_big = jax.random.uniform(k_big, (B2, 1), dtype=jnp.float32)
    out_big = jax.block_until_ready(rff_mlp_block(std_big, params))
    ref_big = reference(std_big, params)
    assert out_big.shape == (B2, 512) and out_big.dtype == jnp.float32
    assert jnp.allclose(out_big, ref_big, atol=1e-4, rtol=1e-4), \
        "large-batch mismatch vs reference"

    print("KERNEL_OK")
</pallas_src>

<mosaic_0001>
module attributes {stable_mosaic.version = 11 : i64} {
  func.func @_rff_mlp_kernel(%arg0: i32, %arg1: memref<8x1xf32, #tpu.memory_space<vmem>>, %arg2: memref<1x32xf32, #tpu.memory_space<vmem>>, %arg3: memref<32x128xf32, #tpu.memory_space<vmem>>, %arg4: memref<32x128xf32, #tpu.memory_space<vmem>>, %arg5: memref<1x128xf32, #tpu.memory_space<vmem>>, %arg6: memref<128x256xf32, #tpu.memory_space<vmem>>, %arg7: memref<1x256xf32, #tpu.memory_space<vmem>>, %arg8: memref<256x512xf32, #tpu.memory_space<vmem>>, %arg9: memref<1x512xf32, #tpu.memory_space<vmem>>, %arg10: memref<8x512xf32, #tpu.memory_space<vmem>>) attributes {dimension_semantics = [#tpu.dimension_semantics<parallel>], iteration_bounds = array<i64: 1>, scalar_prefetch = 0 : i64, scratch_operands = 0 : i64, tpu.core_type = #tpu.core_type<tc>, window_params = [{transform_indices = @transform_0, window_bounds = array<i64: 8, 1>}, {pipeline_mode = #tpu.pipeline_mode<synchronous>, transform_indices = @transform_1, window_bounds = array<i64: 1, 32>}, {pipeline_mode = #tpu.pipeline_mode<synchronous>, transform_indices = @transform_2, window_bounds = array<i64: 32, 128>}, {pipeline_mode = #tpu.pipeline_mode<synchronous>, transform_indices = @transform_3, window_bounds = array<i64: 32, 128>}, {pipeline_mode = #tpu.pipeline_mode<synchronous>, transform_indices = @transform_4, window_bounds = array<i64: 1, 128>}, {pipeline_mode = #tpu.pipeline_mode<synchronous>, transform_indices = @transform_5, window_bounds = array<i64: 128, 256>}, {pipeline_mode = #tpu.pipeline_mode<synchronous>, transform_indices = @transform_6, window_bounds = array<i64: 1, 256>}, {pipeline_mode = #tpu.pipeline_mode<synchronous>, transform_indices = @transform_7, window_bounds = array<i64: 256, 512>}, {pipeline_mode = #tpu.pipeline_mode<synchronous>, transform_indices = @transform_8, window_bounds = array<i64: 1, 512>}, {transform_indices = @transform_9, window_bounds = array<i64: 8, 512>}]} {
    %c0 = arith.constant 0 : index
    %c0_0 = arith.constant 0 : index
    %0 = vector.load %arg1[%c0, %c0_0] : memref<8x1xf32, #tpu.memory_space<vmem>>, vector<8x1xf32>
    %c0_1 = arith.constant 0 : index
    %c0_2 = arith.constant 0 : index
    %1 = vector.load %arg2[%c0_1, %c0_2] : memref<1x32xf32, #tpu.memory_space<vmem>>, vector<1x32xf32>
    %2 = vector.broadcast %0 : vector<8x1xf32> to vector<8x32xf32>
    %3 = vector.broadcast %1 : vector<1x32xf32> to vector<8x32xf32>
    %4 = arith.mulf %2, %3 : vector<8x32xf32>
    %5 = math.sin %4 : vector<8x32xf32>
    %6 = math.cos %4 : vector<8x32xf32>
    %c0_3 = arith.constant 0 : index
    %c0_4 = arith.constant 0 : index
    %7 = vector.load %arg3[%c0_3, %c0_4] : memref<32x128xf32, #tpu.memory_space<vmem>>, vector<32x128xf32>
    %cst = arith.constant dense<0.000000e+00> : vector<8x128xf32>
    %8 = tpu.matmul %5, %7, %cst {dimension_numbers = #tpu.dot_dimension_numbers<[1], [0], [0], [1], [0, 0, 1, 1], [], []>} : vector<8x32xf32>, vector<32x128xf32>, vector<8x128xf32> -> vector<8x128xf32>
    %c0_5 = arith.constant 0 : index
    %c0_6 = arith.constant 0 : index
    %9 = vector.load %arg4[%c0_5, %c0_6] : memref<32x128xf32, #tpu.memory_space<vmem>>, vector<32x128xf32>
    %cst_7 = arith.constant dense<0.000000e+00> : vector<8x128xf32>
    %10 = tpu.matmul %6, %9, %cst_7 {dimension_numbers = #tpu.dot_dimension_numbers<[1], [0], [0], [1], [0, 0, 1, 1], [], []>} : vector<8x32xf32>, vector<32x128xf32>, vector<8x128xf32> -> vector<8x128xf32>
    %11 = arith.addf %8, %10 : vector<8x128xf32>
    %c0_8 = arith.constant 0 : index
    %c0_9 = arith.constant 0 : index
    %12 = vector.load %arg5[%c0_8, %c0_9] : memref<1x128xf32, #tpu.memory_space<vmem>>, vector<1x128xf32>
    %13 = vector.broadcast %12 : vector<1x128xf32> to vector<8x128xf32>
    %14 = arith.addf %11, %13 : vector<8x128xf32>
    %cst_10 = arith.constant 0.000000e+00 : f32
    %15 = vector.broadcast %cst_10 : f32 to vector<8x128xf32>
    %16 = arith.maximumf %14, %15 : vector<8x128xf32>
    %c0_11 = arith.constant 0 : index
    %c0_12 = arith.constant 0 : index
    %17 = vector.load %arg6[%c0_11, %c0_12] : memref<128x256xf32, #tpu.memory_space<vmem>>, vector<128x256xf32>
    %cst_13 = arith.constant dense<0.000000e+00> : vector<8x256xf32>
    %18 = tpu.matmul %16, %17, %cst_13 {dimension_numbers = #tpu.dot_dimension_numbers<[1], [0], [0], [1], [0, 0, 1, 1], [], []>} : vector<8x128xf32>, vector<128x256xf32>, vector<8x256xf32> -> vector<8x256xf32>
    %c0_14 = arith.constant 0 : index
    %c0_15 = arith.constant 0 : index
    %19 = vector.load %arg7[%c0_14, %c0_15] : memref<1x256xf32, #tpu.memory_space<vmem>>, vector<1x256xf32>
    %20 = vector.broadcast %19 : vector<1x256xf32> to vector<8x256xf32>
    %21 = arith.addf %18, %20 : vector<8x256xf32>
    %cst_16 = arith.constant 0.000000e+00 : f32
    %22 = vector.broadcast %cst_16 : f32 to vector<8x256xf32>
    %23 = arith.maximumf %21, %22 : vector<8x256xf32>
    %c0_17 = arith.constant 0 : index
    %c0_18 = arith.constant 0 : index
    %24 = vector.load %arg8[%c0_17, %c0_18] : memref<256x512xf32, #tpu.memory_space<vmem>>, vector<256x512xf32>
    %cst_19 = arith.constant dense<0.000000e+00> : vector<8x512xf32>
    %25 = tpu.matmul %23, %24, %cst_19 {dimension_numbers = #tpu.dot_dimension_numbers<[1], [0], [0], [1], [0, 0, 1, 1], [], []>} : vector<8x256xf32>, vector<256x512xf32>, vector<8x512xf32> -> vector<8x512xf32>
    %c0_20 = arith.constant 0 : index
    %c0_21 = arith.constant 0 : index
    %26 = vector.load %arg9[%c0_20, %c0_21] : memref<1x512xf32, #tpu.memory_space<vmem>>, vector<1x512xf32>
    %27 = vector.broadcast %26 : vector<1x512xf32> to vector<8x512xf32>
    %28 = arith.addf %25, %27 : vector<8x512xf32>
    %cst_22 = arith.constant 0.000000e+00 : f32
    %29 = vector.broadcast %cst_22 : f32 to vector<8x512xf32>
    %30 = arith.maximumf %28, %29 : vector<8x512xf32>
    %c0_23 = arith.constant 0 : index
    %c0_24 = arith.constant 0 : index
    %31 = vector.load %arg10[%c0_23, %c0_24] : memref<8x512xf32, #tpu.memory_space<vmem>>, vector<8x512xf32>
    tpu.vector_store %arg10[%c0_23, %c0_24], %30 {strides = array<i32>} : memref<8x512xf32, #tpu.memory_space<vmem>>, vector<8x512xf32>,
    return
  }
  func.func @transform_0(%arg0: i32) -> (i32, i32) {
    %c0_i32 = arith.constant 0 : i32
    %c0_i32_0 = arith.constant 0 : i32
    return %arg0, %c0_i32 : i32, i32
  }
  func.func @transform_1(%arg0: i32) -> (i32, i32) {
    %c0_i32 = arith.constant 0 : i32
    %c0_i32_0 = arith.constant 0 : i32
    %c0_i32_1 = arith.constant 0 : i32
    return %c0_i32, %c0_i32_0 : i32, i32
  }
  func.func @transform_2(%arg0: i32) -> (i32, i32) {
    %c0_i32 = arith.constant 0 : i32
    %c0_i32_0 = arith.constant 0 : i32
    %c0_i32_1 = arith.constant 0 : i32
    return %c0_i32, %c0_i32_0 : i32, i32
  }
  func.func @transform_3(%arg0: i32) -> (i32, i32) {
    %c0_i32 = arith.constant 0 : i32
    %c0_i32_0 = arith.constant 0 : i32
    %c0_i32_1 = arith.constant 0 : i32
    return %c0_i32, %c0_i32_0 : i32, i32
  }
  func.func @transform_4(%arg0: i32) -> (i32, i32) {
    %c0_i32 = arith.constant 0 : i32
    %c0_i32_0 = arith.constant 0 : i32
    %c0_i32_1 = arith.constant 0 : i32
    return %c0_i32, %c0_i32_0 : i32, i32
  }
  func.func @transform_5(%arg0: i32) -> (i32, i32) {
    %c0_i32 = arith.constant 0 : i32
    %c0_i32_0 = arith.constant 0 : i32
    %c0_i32_1 = arith.constant 0 : i32
    return %c0_i32, %c0_i32_0 : i32, i32
  }
  func.func @transform_6(%arg0: i32) -> (i32, i32) {
    %c0_i32 = arith.constant 0 : i32
    %c0_i32_0 = arith.constant 0 : i32
    %c0_i32_1 = arith.constant 0 : i32
    return %c0_i32, %c0_i32_0 : i32, i32
  }
  func.func @transform_7(%arg0: i32) -> (i32, i32) {
    %c0_i32 = arith.constant 0 : i32
    %c0_i32_0 = arith.constant 0 : i32
    %c0_i32_1 = arith.constant 0 : i32
    return %c0_i32, %c0_i32_0 : i32, i32
  }
  func.func @transform_8(%arg0: i32) -> (i32, i32) {
    %c0_i32 = arith.constant 0 : i32
    %c0_i32_0 = arith.constant 0 : i32
    %c0_i32_1 = arith.constant 0 : i32
    return %c0_i32, %c0_i32_0 : i32, i32
  }
  func.func @transform_9(%arg0: i32) -> (i32, i32) {
    %c0_i32 = arith.constant 0 : i32
    %c0_i32_0 = arith.constant 0 : i32
    return %arg0, %c0_i32 : i32, i32
  }
}

</mosaic_0001>

<llo_original>
// kernel: tpu_custom_call.1
$region0: #{tpu_custom_call.1}
  #allocation0 [shape = 'u32[]', space=smem, size = 0x4, offset = 0x4, fixed_abs, tag = 'smem constant byte address 0x4 - core index']
  #allocation1 [shape = 'u32[144,128]{1,0:T(1,128)}', space=vmem, size = 0x12000, scoped, tag = 'internal scratch']
  %s0 = inlined_call_operand.vmem [shape: f32[2,1], index: 0, kind: input, shape index: {}]
  %s1 = inlined_call_operand.vmem [shape: f32[1,32], index: 1, kind: input, shape index: {}]
  %s2 = inlined_call_operand.hbm [shape: f32[32,128], index: 2, kind: input, shape index: {}]
  %s3 = inlined_call_operand.hbm [shape: f32[32,128], index: 3, kind: input, shape index: {}]
  %s4 = inlined_call_operand.vmem [shape: f32[1,128], index: 4, kind: input, shape index: {}]
  %s5 = inlined_call_operand.hbm [shape: f32[128,256], index: 5, kind: input, shape index: {}]
  %s6 = inlined_call_operand.vmem [shape: f32[1,256], index: 6, kind: input, shape index: {}]
  %s7 = inlined_call_operand.hbm [shape: f32[256,512], index: 7, kind: input, shape index: {}]
  %s8 = inlined_call_operand.vmem [shape: f32[1,512], index: 8, kind: input, shape index: {}]
  %s9 = inlined_call_operand.hbm [shape: f32[2,512], index: 9, kind: output, shape index: {}]
  %s10 = sld [smem:[#allocation0]]
  $region62: #{tpu_custom_call.1} parent=0
    _
  %s12 = ssub.s32 1, %s10
  %s13 = scalar_select 0, %s12, %s10
  $region1: #{tpu_custom_call.1} parent=0
    #allocation2 [shape = 'u8[16384]{0}', space=vmem, size = 0x4000, scoped, tag = 'input window, operand 2, single buffered']
    #allocation3 [shape = 's32[1]{0}', space=sflag, size = 0x4, scoped, tag = 'scoped memory for tpu_custom_call.1']
    #allocation4 [shape = 's32[1]{0}', space=sflag, size = 0x4, scoped, tag = 'scoped memory for tpu_custom_call.1']
    #allocation5 [shape = 'u8[16384]{0}', space=vmem, size = 0x4000, scoped, tag = 'input window, operand 3, single buffered']
    #allocation6 [shape = 's32[1]{0}', space=sflag, size = 0x4, scoped, tag = 'scoped memory for tpu_custom_call.1']
    #allocation7 [shape = 'u8[131072]{0}', space=vmem, size = 0x20000, scoped, tag = 'input window, operand 5, single buffered']
    #allocation8 [shape = 'u8[524288]{0}', space=vmem, size = 0x80000, scoped, tag = 'input window, operand 7, single buffered']
    #allocation9 [shape = 's32[1]{0}', space=sflag, size = 0x4, scoped, tag = 'scoped memory for tpu_custom_call.1']
    #allocation10 [shape = 'u8[16384]{0}', space=vmem, size = 0x4000, scoped, tag = 'output window, operand 0, single buffered']
    %14 = vsyncpa [#allocation3], 0
    %15 = vsyncpa [#allocation6], 0
    %16 = vsyncpa [#allocation9], 0
    %17 = vsyncpa [#allocation4], 0
    // Predicated region
    $region2: #{tpu_custom_call.1} parent=1 // pred_check
      _
    $region3: #{tpu_custom_call.1} parent=1 // pred_check_branch
      %19 = sbr.rel (0) target = $region5
    $region4: #{tpu_custom_call.1} parent=1 // pred_region
      _
    $region5: #{tpu_custom_call.1} parent=1 // pred_fallthru
      _
    // Predicated region
    $region6: #{tpu_custom_call.1} parent=1 // pred_check
      _
    $region7: #{tpu_custom_call.1} parent=1 // pred_check_branch
      %21 = sbr.rel (0) target = $region9
    $region8: #{tpu_custom_call.1} parent=1 // pred_region
      _
    $region9: #{tpu_custom_call.1} parent=1 // pred_fallthru
      _
    // Predicated region
    $region10: #{tpu_custom_call.1} parent=1 // pred_check
      _
    $region11: #{tpu_custom_call.1} parent=1 // pred_check_branch
      %23 = sbr.rel (0) target = $region13
    $region12: #{tpu_custom_call.1} parent=1 // pred_region
      %s25 = ssub.s32 512, 512
      %26 = vsyncadd [#allocation3], %s25
      %s27 = sshll.u32 [#allocation2], 4
      %s28 = int_to_ptr.vmem [resolvable:$true] %s27
      %33 = dma.hbm_to_vmem [thread:$0]  %s2, 512, %s28, [#allocation3], 128, 128, 8
    $region13: #{tpu_custom_call.1} parent=1 // pred_fallthru
      _
    // Predicated region
    $region14: #{tpu_custom_call.1} parent=1 // pred_check
      _
    $region15: #{tpu_custom_call.1} parent=1 // pred_check_branch
      %35 = sbr.rel (0) target = $region17
    $region16: #{tpu_custom_call.1} parent=1 // pred_region
      %s37 = ssub.s32 512, 512
      %38 = vsyncadd [#allocation6], %s37
      %s39 = sshll.u32 [#allocation5], 4
      %s40 = int_to_ptr.vmem [resolvable:$true] %s39
      %45 = dma.hbm_to_vmem [thread:$0]  %s3, 512, %s40, [#allocation6], 128, 128, 8
    $region17: #{tpu_custom_call.1} parent=1 // pred_fallthru
      _
    // Predicated region
    $region18: #{tpu_custom_call.1} parent=1 // pred_check
      _
    $region19: #{tpu_custom_call.1} parent=1 // pred_check_branch
      %47 = sbr.rel (0) target = $region21
    $region20: #{tpu_custom_call.1} parent=1 // pred_region
      _
    $region21: #{tpu_custom_call.1} parent=1 // pred_fallthru
      _
    // Predicated region
    $region22: #{tpu_custom_call.1} parent=1 // pred_check
      _
    $region23: #{tpu_custom_call.1} parent=1 // pred_check_branch
      %49 = sbr.rel (0) target = $region25
    $region24: #{tpu_custom_call.1} parent=1 // pred_region
      %s51 = ssub.s32 4096, 4096
      %52 = vsyncadd [#allocation6], %s51
      %s53 = sshll.u32 [#allocation7], 4
      %s54 = int_to_ptr.vmem [resolvable:$true] %s53
      %59 = dma.hbm_to_vmem [thread:$0]  %s5, 4096, %s54, [#allocation6], 256, 256, 16
    $region25: #{tpu_custom_call.1} parent=1 // pred_fallthru
      _
    // Predicated region
    $region26: #{tpu_custom_call.1} parent=1 // pred_check
      _
    $region27: #{tpu_custom_call.1} parent=1 // pred_check_branch
      %61 = sbr.rel (0) target = $region29
    $region28: #{tpu_custom_call.1} parent=1 // pred_region
      _
    $region29: #{tpu_custom_call.1} parent=1 // pred_fallthru
      _
    // Predicated region
    $region30: #{tpu_custom_call.1} parent=1 // pred_check
      _
    $region31: #{tpu_custom_call.1} parent=1 // pred_check_branch
      %63 = sbr.rel (0) target = $region33
    $region32: #{tpu_custom_call.1} parent=1 // pred_region
      %s65 = ssub.s32 16384, 16384
      %66 = vsyncadd [#allocation9], %s65
      %s67 = sshll.u32 [#allocation8], 4
      %s68 = int_to_ptr.vmem [resolvable:$true] %s67
      %73 = dma.hbm_to_vmem [thread:$0]  %s7, 16384, %s68, [#allocation9], 512, 512, 32
    $region33: #{tpu_custom_call.1} parent=1 // pred_fallthru
      _
    // Predicated region
    $region34: #{tpu_custom_call.1} parent=1 // pred_check
      _
    $region35: #{tpu_custom_call.1} parent=1 // pred_check_branch
      %75 = sbr.rel (0) target = $region37
    $region36: #{tpu_custom_call.1} parent=1 // pred_region
      _
    $region37: #{tpu_custom_call.1} parent=1 // pred_fallthru
      _
    // Predicated region
    $region38: #{tpu_custom_call.1} parent=1 // pred_check
      _
    $region39: #{tpu_custom_call.1} parent=1 // pred_check_branch
      %77 = sbr.rel (0) target = $region41
    $region40: #{tpu_custom_call.1} parent=1 // pred_region
      %78 = dma.done [#allocation3], 512
    $region41: #{tpu_custom_call.1} parent=1 // pred_fallthru
      _
    // Predicated region
    $region42: #{tpu_custom_call.1} parent=1 // pred_check
      _
    $region43: #{tpu_custom_call.1} parent=1 // pred_check_branch
      %80 = sbr.rel (0) target = $region45
    $region44: #{tpu_custom_call.1} parent=1 // pred_region
      %81 = dma.done [#allocation6], 512
    $region45: #{tpu_custom_call.1} parent=1 // pred_fallthru
      _
    // Predicated region
    $region46: #{tpu_custom_call.1} parent=1 // pred_check
      _
    $region47: #{tpu_custom_call.1} parent=1 // pred_check_branch
      %83 = sbr.rel (0) target = $region49
    $region48: #{tpu_custom_call.1} parent=1 // pred_region
      %84 = dma.done [#allocation6], 4096
    $region49: #{tpu_custom_call.1} parent=1 // pred_fallthru
      _
    // Predicated region
    $region50: #{tpu_custom_call.1} parent=1 // pred_check
      _
    $region51: #{tpu_custom_call.1} parent=1 // pred_check_branch
      %86 = sbr.rel (0) target = $region53
    $region52: #{tpu_custom_call.1} parent=1 // pred_region
      %87 = dma.done [#allocation9], 16384
    $region53: #{tpu_custom_call.1} parent=1 // pred_fallthru
      _
    %v88 = vld [vmem:[%s0] sm:$0xff]
    %v89 = vld [vmem:[%s1] sm:$0x1]
    %91 = vset.pattern.permute.xlu0 0
    %92 = vperm.xlu0 %91, %v88
    %v93 = vpop.permute.xlu0 %92
    %v96 = vlaneseq
    %v97 = vshrl.u32 %v96, 7
    %v98 = vsub.s32 0, %v97
    %v99 = vrot.slane %v89, %v98
    %v101 = vmul.f32 %v93, %v99
    %v102 = vand.u32 2147483647, %v101
    %vm103 = vcmp.le.f32.partialorder %v102, 0.7853982
    %vm104 = vcmp.lt.s32.totalorder %v101, 0
    %v105 = vand.u32 %v101, 2139095040
    %v106 = vshrl.u32 %v105, 23
    %v107 = vsub.s32 %v106, 127
    %v108 = vand.u32 2147483647, %v101
    %v109 = vand.u32 %v108, 8388607
    %v110 = vor.u32 %v109, 8388608
    %v111 = vsub.s32 0, %v110
    %v112 = vadd.s32 %v107, 1
    %vm113 = vcmp.gt.s32.totalorder %v112, 0
    %v114 = vsel %vm113, %v112, 0
    %v115 = vshrl.u32 %v114, 5
    %v116 = vand.u32 %v114, 31
    %v117 = vsub.s32 32, %v116
    %v118 = vshrl.u32 683565275, %v117
    %v119 = vshll.u32 683565275, %v116
    %v120 = vshrl.u32 2475754826, %v117
    %v121 = vor.u32 %v119, %v120
    %v122 = vshll.u32 2475754826, %v116
    %v123 = vshrl.u32 2131351028, %v117
    %v124 = vor.u32 %v122, %v123
    %v125 = vshll.u32 2131351028, %v116
    %v126 = vshrl.u32 2102212464, %v117
    %v127 = vor.u32 %v125, %v126
    %v128 = vshll.u32 2102212464, %v116
    %v129 = vshrl.u32 920167782, %v117
    %v130 = vor.u32 %v128, %v129
    %v131 = vshll.u32 920167782, %v116
    %v132 = vshrl.u32 1326507024, %v117
    %v133 = vor.u32 %v131, %v132
    %vm134 = vcmp.lt.s32.totalorder %v115, 1
    %vm135 = vcmp.lt.s32.totalorder %v115, 2
    %vm136 = vcmp.lt.s32.totalorder %v115, 3
    %vm137 = vcmp.lt.s32.totalorder %v115, 4
    %v138 = vsel %vm134, %v118, %v121
    %v139 = vsel %vm137, %v127, 2102212464
    %v140 = vsel %vm136, %v124, %v139
    %v141 = vsel %vm135, %v138, %v140
    %v142 = vsel %vm134, %v121, %v124
    %v143 = vsel %vm137, %v130, 920167782
    %v144 = vsel %vm136, %v127, %v143
    %v145 = vsel %vm135, %v142, %v144
    %v146 = vsel %vm134, %v124, %v127
    %v147 = vsel %vm137, %v133, 1326507024
    %v148 = vsel %vm136, %v130, %v147
    %v149 = vsel %vm135, %v146, %v148
    %v150 = vshll.u32 %v110, 8
    %v151 = vmul.u32.u64.compose %v150, %v149
    %v152 = vextract.low.u32 %v151
    %v153 = vextract.high.u32 %v151
    %v154 = vmul.u32.u64.compose %v150, %v145
    %v155 = vextract.low.u32 %v154
    %v156 = vextract.high.u32 %v154
    %v157 = vmul.u32 %v150, %v141
    %v158 = vadd.s32 %v153, %v155
    %vm159 = vc.u32 %v153, %v155
    %v160 = vadd.s32 %v156, 1
    %v161 = vsel %vm159, %v160, %v156
    %v162 = vadd.s32 %v157, %v161
    %v163 = vadd.s32 %v162, 536870912
    %v164 = vshrl.u32 %v163, 30
    %v165 = vshll.u32 %v164, 30
    %v166 = vsub.s32 %v162, %v165
    %vm167 = vcmp.lt.s32.totalorder %v166, 0
    %v168 = vsub.s32 0, %v166
    %v169 = vsel %vm167, %v168, %v166
    %v170 = vclz %v169
    %v171 = vsub.s32 %v170, 2
    %vm172 = vcmp.gt.s32.totalorder 0, %v171
    %v173 = vsel %vm172, 0, %v171
    %v174 = vsub.s32 32, %v173
    %v175 = vshll.u32 %v166, %v173
    %v176 = vshrl.u32 %v158, %v174
    %v177 = vor.u32 %v175, %v176
    %v178 = vsub.s32 4294967266, %v173
    %v179 = vadd.s32 %v178, 127
    %v180 = vshll.u32 %v179, 23
    %v181 = vor.u32 4788187, %v180
    %v182 = vand.u32 2147483647, %v181
    %v184 = vcvt.s32.f32 %v177
    %v185 = vmul.f32 %v184, %v182
    %v186 = vxor.u32 %v185, 2147483648
    %v187 = vsel %vm104, %v186, %v185
    %v188 = vsub.s32 4, %v164
    %v189 = vsel %vm104, %v188, %v164
    %v190 = vsel %vm103, %v101, %v187
    %v191 = vsel %vm103, 0, %v189
    %v192 = vcosq.f32.pop %v190
    %v193 = vsinq.f32.pop %v190
    %vm194 = vweird.f32 %v101
    %v195 = vadd.s32 %v191, 3
    %v196 = vand.u32 %v195, 3
    %vm197 = vcmp.lt.s32.totalorder %v196, 2
    %vm198 = vcmp.eq.s32.totalorder %v196, 0
    %v199 = vxor.u32 %v193, 2147483648
    %v200 = vsel %vm198, %v192, %v199
    %vm201 = vcmp.eq.s32.totalorder %v196, 2
    %v202 = vxor.u32 %v192, 2147483648
    %v203 = vsel %vm201, %v202, %v193
    %v204 = vsel %vm197, %v200, %v203
    %v205 = vsel %vm194, nan, %v204
    %v206 = vand.u32 2147483647, %v101
    %vm207 = vcmp.le.f32.partialorder %v206, 0.7853982
    %vm208 = vcmp.lt.s32.totalorder %v101, 0
    %v209 = vand.u32 %v101, 2139095040
    %v210 = vshrl.u32 %v209, 23
    %v211 = vsub.s32 %v210, 127
    %v212 = vand.u32 2147483647, %v101
    %v213 = vand.u32 %v212, 8388607
    %v214 = vor.u32 %v213, 8388608
    %v215 = vsub.s32 0, %v214
    %v216 = vadd.s32 %v211, 1
    %vm217 = vcmp.gt.s32.totalorder %v216, 0
    %v218 = vsel %vm217, %v216, 0
    %v219 = vshrl.u32 %v218, 5
    %v220 = vand.u32 %v218, 31
    %v221 = vsub.s32 32, %v220
    %v222 = vshrl.u32 683565275, %v221
    %v223 = vshll.u32 683565275, %v220
    %v224 = vshrl.u32 2475754826, %v221
    %v225 = vor.u32 %v223, %v224
    %v226 = vshll.u32 2475754826, %v220
    %v227 = vshrl.u32 2131351028, %v221
    %v228 = vor.u32 %v226, %v227
    %v229 = vshll.u32 2131351028, %v220
    %v230 = vshrl.u32 2102212464, %v221
    %v231 = vor.u32 %v229, %v230
    %v232 = vshll.u32 2102212464, %v220
    %v233 = vshrl.u32 920167782, %v221
    %v234 = vor.u32 %v232, %v233
    %v235 = vshll.u32 920167782, %v220
    %v236 = vshrl.u32 1326507024, %v221
    %v237 = vor.u32 %v235, %v236
    %vm238 = vcmp.lt.s32.totalorder %v219, 1
    %vm239 = vcmp.lt.s32.totalorder %v219, 2
    %vm240 = vcmp.lt.s32.totalorder %v219, 3
    %vm241 = vcmp.lt.s32.totalorder %v219, 4
    %v242 = vsel %vm238, %v222, %v225
    %v243 = vsel %vm241, %v231, 2102212464
    %v244 = vsel %vm240, %v228, %v243
    %v245 = vsel %vm239, %v242, %v244
    %v246 = vsel %vm238, %v225, %v228
    %v247 = vsel %vm241, %v234, 920167782
    %v248 = vsel %vm240, %v231, %v247
    %v249 = vsel %vm239, %v246, %v248
    %v250 = vsel %vm238, %v228, %v231
    %v251 = vsel %vm241, %v237, 1326507024
    %v252 = vsel %vm240, %v234, %v251
    %v253 = vsel %vm239, %v250, %v252
    %v254 = vshll.u32 %v214, 8
    %v255 = vmul.u32.u64.compose %v254, %v253
    %v256 = vextract.low.u32 %v255
    %v257 = vextract.high.u32 %v255
    %v258 = vmul.u32.u64.compose %v254, %v249
    %v259 = vextract.low.u32 %v258
    %v260 = vextract.high.u32 %v258
    %v261 = vmul.u32 %v254, %v245
    %v262 = vadd.s32 %v257, %v259
    %vm263 = vc.u32 %v257, %v259
    %v264 = vadd.s32 %v260, 1
    %v265 = vsel %vm263, %v264, %v260
    %v266 = vadd.s32 %v261, %v265
    %v267 = vadd.s32 %v266, 536870912
    %v268 = vshrl.u32 %v267, 30
    %v269 = vshll.u32 %v268, 30
    %v270 = vsub.s32 %v266, %v269
    %vm271 = vcmp.lt.s32.totalorder %v270, 0
    %v272 = vsub.s32 0, %v270
    %v273 = vsel %vm271, %v272, %v270
    %v274 = vclz %v273
    %v275 = vsub.s32 %v274, 2
    %vm276 = vcmp.gt.s32.totalorder 0, %v275
    %v277 = vsel %vm276, 0, %v275
    %v278 = vsub.s32 32, %v277
    %v279 = vshll.u32 %v270, %v277
    %v280 = vshrl.u32 %v262, %v278
    %v281 = vor.u32 %v279, %v280
    %v282 = vsub.s32 4294967266, %v277
    %v283 = vadd.s32 %v282, 127
    %v284 = vshll.u32 %v283, 23
    %v285 = vor.u32 4788187, %v284
    %v286 = vand.u32 2147483647, %v285
    %v288 = vcvt.s32.f32 %v281
    %v289 = vmul.f32 %v288, %v286
    %v290 = vxor.u32 %v289, 2147483648
    %v291 = vsel %vm208, %v290, %v289
    %v292 = vsub.s32 4, %v268
    %v293 = vsel %vm208, %v292, %v268
    %v294 = vsel %vm207, %v101, %v291
    %v295 = vsel %vm207, 0, %v293
    %v296 = vcosq.f32.pop %v294
    %v297 = vsinq.f32.pop %v294
    %vm298 = vweird.f32 %v101
    %v299 = vand.u32 %v295, 3
    %vm300 = vcmp.lt.s32.totalorder %v299, 2
    %vm301 = vcmp.eq.s32.totalorder %v299, 0
    %v302 = vxor.u32 %v297, 2147483648
    %v303 = vsel %vm301, %v296, %v302
    %vm304 = vcmp.eq.s32.totalorder %v299, 2
    %v305 = vxor.u32 %v296, 2147483648
    %v306 = vsel %vm304, %v305, %v297
    %v307 = vsel %vm300, %v303, %v306
    %v308 = vsel %vm298, nan, %v307
    %v309 = vld [vmem:[#allocation2] sm:$0xff]
    %v310 = vld [vmem:[#allocation2 + $0x8] sm:$0xff]
    %v311 = vld [vmem:[#allocation2 + $0x10] sm:$0xff]
    %v312 = vld [vmem:[#allocation2 + $0x18] sm:$0xff]
    %v313 = vld [vmem:[#allocation5] sm:$0xff]
    %v314 = vld [vmem:[#allocation5 + $0x8] sm:$0xff]
    %v315 = vld [vmem:[#allocation5 + $0x10] sm:$0xff]
    %v316 = vld [vmem:[#allocation5 + $0x18] sm:$0xff]
    %vm317 = vcmask 261120
    %v319 = vsel %vm317, %v308, 0
    %321 = vmatprep.subr.mxu0 0.0
    %322 = vmatpush1.msra.mxu0 %v313
    %323 = vmatprep.subr.mxu0 0.0
    %324 = vmatpush1.msra.mxu0 %v314
    %325 = vmatprep.subr.mxu0 0.0
    %326 = vmatpush1.msra.mxu0 %v315
    %327 = vmatprep.subr.mxu0 0.0
    %328 = vmatpush1.msra.mxu0 %v316
    %329 = vmatprep.subr.mxu0 0.0
    %330 = vmatpush1.msra.mxu0 0.0
    %331 = vmatprep.subr.mxu0 0.0
    %332 = vmatpush1.msra.mxu0 0.0
    %333 = vmatprep.subr.mxu0 0.0
    %334 = vmatpush1.msra.mxu0 0.0
    %335 = vmatprep.subr.mxu0 0.0
    %336 = vmatpush1.msra.mxu0 0.0
    %337 = vmatprep.subr.mxu0 0.0
    %338 = vmatpush1.msra.mxu0 0.0
    %339 = vmatprep.subr.mxu0 0.0
    %340 = vmatpush1.msra.mxu0 0.0
    %341 = vmatprep.subr.mxu0 0.0
    %342 = vmatpush1.msra.mxu0 0.0
    %343 = vmatprep.subr.mxu0 0.0
    %344 = vmatpush1.msra.mxu0 0.0
    %345 = vmatprep.subr.mxu0 0.0
    %346 = vmatpush1.msra.mxu0 0.0
    %347 = vmatprep.subr.mxu0 0.0
    %348 = vmatpush1.msra.mxu0 0.0
    %349 = vmatprep.subr.mxu0 0.0
    %350 = vmatpush1.msra.mxu0 0.0
    %351 = vmatprep.subr.mxu0 0.0
    %352 = vmatpush1.msra.mxu0 0.0
    %353 = vmatprep.subr.mxu0 0.0
    %354 = vmatpush1.msra.mxu0 0.0
    %355 = vmatprep.subr.mxu0 0.0
    %356 = vmatpush1.msra.mxu0 0.0
    %357 = vmatprep.subr.mxu0 0.0
    %358 = vmatpush1.msra.mxu0 0.0
    %359 = vmatprep.subr.mxu0 0.0
    %360 = vmatpush1.msra.mxu0 0.0
    %361 = vmatprep.subr.mxu0 0.0
    %362 = vmatpush1.msra.mxu0 0.0
    %363 = vmatprep.subr.mxu0 0.0
    %364 = vmatpush1.msra.mxu0 0.0
    %365 = vmatprep.subr.mxu0 0.0
    %366 = vmatpush1.msra.mxu0 0.0
    %367 = vmatprep.subr.mxu0 0.0
    %368 = vmatpush1.msra.mxu0 0.0
    %369 = vmatprep.subr.mxu0 0.0
    %370 = vmatpush1.msra.mxu0 0.0
    %371 = vmatprep.subr.mxu0 0.0
    %372 = vmatpush1.msra.mxu0 0.0
    %373 = vmatprep.subr.mxu0 0.0
    %374 = vmatpush1.msra.mxu0 0.0
    %375 = vmatprep.subr.mxu0 0.0
    %376 = vmatpush1.msra.mxu0 0.0
    %377 = vmatprep.subr.mxu0 0.0
    %378 = vmatpush1.msra.mxu0 0.0
    %379 = vmatprep.subr.mxu0 0.0
    %380 = vmatpush1.msra.mxu0 0.0
    %381 = vmatprep.subr.mxu0 0.0
    %382 = vmatpush1.msra.mxu0 0.0
    %383 = vmatprep.subr.mxu0 0.0
    %384 = vmatpush1.msra.mxu0 0.0
    %385 = vmatprep.mubr.f32.mxu0 0.0
    %386 = vmatmul.mubr.f32.gmra.mrb[0].mxu0 %v319
    %v387 = vpop.f32.mrb[0].mxu0
    %v388 = vadd.f32 0.0, %v387
    %v389 = vpop.f32.mrb[0].mxu0
    %390 = vdwg.mxu0
    %v392 = vsel %vm317, %v205, 0
    %394 = vmatprep.subr.mxu0 0.0
    %395 = vmatpush1.msra.mxu0 %v309
    %396 = vmatprep.subr.mxu0 0.0
    %397 = vmatpush1.msra.mxu0 %v310
    %398 = vmatprep.subr.mxu0 0.0
    %399 = vmatpush1.msra.mxu0 %v311
    %400 = vmatprep.subr.mxu0 0.0
    %401 = vmatpush1.msra.mxu0 %v312
    %402 = vmatprep.subr.mxu0 0.0
    %403 = vmatpush1.msra.mxu0 0.0
    %404 = vmatprep.subr.mxu0 0.0
    %405 = vmatpush1.msra.mxu0 0.0
    %406 = vmatprep.subr.mxu0 0.0
    %407 = vmatpush1.msra.mxu0 0.0
    %408 = vmatprep.subr.mxu0 0.0
    %409 = vmatpush1.msra.mxu0 0.0
    %410 = vmatprep.subr.mxu0 0.0
    %411 = vmatpush1.msra.mxu0 0.0
    %412 = vmatprep.subr.mxu0 0.0
    %413 = vmatpush1.msra.mxu0 0.0
    %414 = vmatprep.subr.mxu0 0.0
    %415 = vmatpush1.msra.mxu0 0.0
    %416 = vmatprep.subr.mxu0 0.0
    %417 = vmatpush1.msra.mxu0 0.0
    %418 = vmatprep.subr.mxu0 0.0
    %419 = vmatpush1.msra.mxu0 0.0
    %420 = vmatprep.subr.mxu0 0.0
    %421 = vmatpush1.msra.mxu0 0.0
    %422 = vmatprep.subr.mxu0 0.0
    %423 = vmatpush1.msra.mxu0 0.0
    %424 = vmatprep.subr.mxu0 0.0
    %425 = vmatpush1.msra.mxu0 0.0
    %426 = vmatprep.subr.mxu0 0.0
    %427 = vmatpush1.msra.mxu0 0.0
    %428 = vmatprep.subr.mxu0 0.0
    %429 = vmatpush1.msra.mxu0 0.0
    %430 = vmatprep.subr.mxu0 0.0
    %431 = vmatpush1.msra.mxu0 0.0
    %432 = vmatprep.subr.mxu0 0.0
    %433 = vmatpush1.msra.mxu0 0.0
    %434 = vmatprep.subr.mxu0 0.0
    %435 = vmatpush1.msra.mxu0 0.0
    %436 = vmatprep.subr.mxu0 0.0
    %437 = vmatpush1.msra.mxu0 0.0
    %438 = vmatprep.subr.mxu0 0.0
    %439 = vmatpush1.msra.mxu0 0.0
    %440 = vmatprep.subr.mxu0 0.0
    %441 = vmatpush1.msra.mxu0 0.0
    %442 = vmatprep.subr.mxu0 0.0
    %443 = vmatpush1.msra.mxu0 0.0
    %444 = vmatprep.subr.mxu0 0.0
    %445 = vmatpush1.msra.mxu0 0.0
    %446 = vmatprep.subr.mxu0 0.0
    %447 = vmatpush1.msra.mxu0 0.0
    %448 = vmatprep.subr.mxu0 0.0
    %449 = vmatpush1.msra.mxu0 0.0
    %450 = vmatprep.subr.mxu0 0.0
    %451 = vmatpush1.msra.mxu0 0.0
    %452 = vmatprep.subr.mxu0 0.0
    %453 = vmatpush1.msra.mxu0 0.0
    %454 = vmatprep.subr.mxu0 0.0
    %455 = vmatpush1.msra.mxu0 0.0
    %456 = vmatprep.subr.mxu0 0.0
    %457 = vmatpush1.msra.mxu0 0.0
    %458 = vmatprep.mubr.f32.mxu0 0.0
    %459 = vmatmul.mubr.f32.gmra.mrb[0].mxu0 %v392
    %v460 = vpop.f32.mrb[0].mxu0
    %v461 = vadd.f32 %v388, %v460
    %v462 = vpop.f32.mrb[0].mxu0
    %463 = vdwg.mxu0
    %v464 = vld [vmem:[%s4] sm:$0x1]
    %v466 = vlaneseq
    %v467 = vshrl.u32 %v466, 7
    %v468 = vsub.s32 0, %v467
    %v469 = vrot.slane %v464, %v468
    %v471 = vadd.f32 %v461, %v469
    %v472 = vmax.f32 %v471, 0.0
    %v473 = vld [vmem:[#allocation7] sm:$0xff]
    %v474 = vld [vmem:[#allocation7 + $0x8] sm:$0xff]
    %v475 = vld [vmem:[#allocation7 + $0x10] sm:$0xff]
    %v476 = vld [vmem:[#allocation7 + $0x18] sm:$0xff]
    %v477 = vld [vmem:[#allocation7 + $0x20] sm:$0xff]
    %v478 = vld [vmem:[#allocation7 + $0x28] sm:$0xff]
    %v479 = vld [vmem:[#allocation7 + $0x30] sm:$0xff]
    %v480 = vld [vmem:[#allocation7 + $0x38] sm:$0xff]
    %v481 = vld [vmem:[#allocation7 + $0x40] sm:$0xff]
    %v482 = vld [vmem:[#allocation7 + $0x48] sm:$0xff]
    %v483 = vld [vmem:[#allocation7 + $0x50] sm:$0xff]
    %v484 = vld [vmem:[#allocation7 + $0x58] sm:$0xff]
    %v485 = vld [vmem:[#allocation7 + $0x60] sm:$0xff]
    %v486 = vld [vmem:[#allocation7 + $0x68] sm:$0xff]
    %v487 = vld [vmem:[#allocation7 + $0x70] sm:$0xff]
    %v488 = vld [vmem:[#allocation7 + $0x78] sm:$0xff]
    %v489 = vld [vmem:[#allocation7 + $0x80] sm:$0xff]
    %v490 = vld [vmem:[#allocation7 + $0x88] sm:$0xff]
    %v491 = vld [vmem:[#allocation7 + $0x90] sm:$0xff]
    %v492 = vld [vmem:[#allocation7 + $0x98] sm:$0xff]
    %v493 = vld [vmem:[#allocation7 + $0xa0] sm:$0xff]
    %v494 = vld [vmem:[#allocation7 + $0xa8] sm:$0xff]
    %v495 = vld [vmem:[#allocation7 + $0xb0] sm:$0xff]
    %v496 = vld [vmem:[#allocation7 + $0xb8] sm:$0xff]
    %v497 = vld [vmem:[#allocation7 + $0xc0] sm:$0xff]
    %v498 = vld [vmem:[#allocation7 + $0xc8] sm:$0xff]
    %v499 = vld [vmem:[#allocation7 + $0xd0] sm:$0xff]
    %v500 = vld [vmem:[#allocation7 + $0xd8] sm:$0xff]
    %v501 = vld [vmem:[#allocation7 + $0xe0] sm:$0xff]
    %v502 = vld [vmem:[#allocation7 + $0xe8] sm:$0xff]
    %v503 = vld [vmem:[#allocation7 + $0xf0] sm:$0xff]
    %v504 = vld [vmem:[#allocation7 + $0xf8] sm:$0xff]
    %v505 = vld [vmem:[%s6] sm:$0x3]
    %v507 = vlaneseq
    %v508 = vshrl.u32 %v507, 7
    %v509 = vsub.s32 0, %v508
    %v510 = vrot.slane %v505, %v509
    %v511 = vlaneseq
    %v512 = vshrl.u32 %v511, 7
    %v513 = vsub.s32 1, %v512
    %v514 = vrot.slane %v505, %v513
    %517 = vmatprep.subr.mxu0 %v474
    %518 = vmatpush1.msra.mxu0 %v473
    %519 = vmatprep.subr.mxu0 %v476
    %520 = vmatpush1.msra.mxu0 %v475
    %521 = vmatprep.subr.mxu0 %v478
    %522 = vmatpush1.msra.mxu0 %v477
    %523 = vmatprep.subr.mxu0 %v480
    %524 = vmatpush1.msra.mxu0 %v479
    %525 = vmatprep.subr.mxu0 %v482
    %526 = vmatpush1.msra.mxu0 %v481
    %527 = vmatprep.subr.mxu0 %v484
    %528 = vmatpush1.msra.mxu0 %v483
    %529 = vmatprep.subr.mxu0 %v486
    %530 = vmatpush1.msra.mxu0 %v485
    %531 = vmatprep.subr.mxu0 %v488
    %532 = vmatpush1.msra.mxu0 %v487
    %533 = vmatprep.subr.mxu0 %v490
    %534 = vmatpush1.msra.mxu0 %v489
    %535 = vmatprep.subr.mxu0 %v492
    %536 = vmatpush1.msra.mxu0 %v491
    %537 = vmatprep.subr.mxu0 %v494
    %538 = vmatpush1.msra.mxu0 %v493
    %539 = vmatprep.subr.mxu0 %v496
    %540 = vmatpush1.msra.mxu0 %v495
    %541 = vmatprep.subr.mxu0 %v498
    %542 = vmatpush1.msra.mxu0 %v497
    %543 = vmatprep.subr.mxu0 %v500
    %544 = vmatpush1.msra.mxu0 %v499
    %545 = vmatprep.subr.mxu0 %v502
    %546 = vmatpush1.msra.mxu0 %v501
    %547 = vmatprep.subr.mxu0 %v504
    %548 = vmatpush1.msra.mxu0 %v503
    %549 = vmatprep.subr.mxu0 0.0
    %550 = vmatpush1.msra.mxu0 0.0
    %551 = vmatprep.subr.mxu0 0.0
    %552 = vmatpush1.msra.mxu0 0.0
    %553 = vmatprep.subr.mxu0 0.0
    %554 = vmatpush1.msra.mxu0 0.0
    %555 = vmatprep.subr.mxu0 0.0
    %556 = vmatpush1.msra.mxu0 0.0
    %557 = vmatprep.subr.mxu0 0.0
    %558 = vmatpush1.msra.mxu0 0.0
    %559 = vmatprep.subr.mxu0 0.0
    %560 = vmatpush1.msra.mxu0 0.0
    %561 = vmatprep.subr.mxu0 0.0
    %562 = vmatpush1.msra.mxu0 0.0
    %563 = vmatprep.subr.mxu0 0.0
    %564 = vmatpush1.msra.mxu0 0.0
    %565 = vmatprep.subr.mxu0 0.0
    %566 = vmatpush1.msra.mxu0 0.0
    %567 = vmatprep.subr.mxu0 0.0
    %568 = vmatpush1.msra.mxu0 0.0
    %569 = vmatprep.subr.mxu0 0.0
    %570 = vmatpush1.msra.mxu0 0.0
    %571 = vmatprep.subr.mxu0 0.0
    %572 = vmatpush1.msra.mxu0 0.0
    %573 = vmatprep.subr.mxu0 0.0
    %574 = vmatpush1.msra.mxu0 0.0
    %575 = vmatprep.subr.mxu0 0.0
    %576 = vmatpush1.msra.mxu0 0.0
    %577 = vmatprep.subr.mxu0 0.0
    %578 = vmatpush1.msra.mxu0 0.0
    %579 = vmatprep.subr.mxu0 0.0
    %580 = vmatpush1.msra.mxu0 0.0
    %581 = vmatprep.mubr.f32.mxu0 0.0
    %582 = vmatmul.mubr.f32.gmra.mrb[0].mxu0 %v472
    %v583 = vpop.f32.mrb[0].mxu0
    %v584 = vadd.f32 %v510, %v583
    %v585 = vpop.f32.mrb[0].mxu0
    %v586 = vadd.f32 %v514, %v585
    %587 = vdwg.mxu0
    %v588 = vmax.f32 %v584, 0.0
    %v589 = vmax.f32 %v586, 0.0
    %v590 = vld [vmem:[#allocation8] sm:$0xff]
    %v591 = vld [vmem:[#allocation8 + $0x8] sm:$0xff]
    %v592 = vld [vmem:[#allocation8 + $0x10] sm:$0xff]
    %v593 = vld [vmem:[#allocation8 + $0x18] sm:$0xff]
    %v594 = vld [vmem:[#allocation8 + $0x20] sm:$0xff]
    %v595 = vld [vmem:[#allocation8 + $0x28] sm:$0xff]
    %v596 = vld [vmem:[#allocation8 + $0x30] sm:$0xff]
    %v597 = vld [vmem:[#allocation8 + $0x38] sm:$0xff]
    %v598 = vld [vmem:[#allocation8 + $0x40] sm:$0xff]
    %v599 = vld [vmem:[#allocation8 + $0x48] sm:$0xff]
    %v600 = vld [vmem:[#allocation8 + $0x50] sm:$0xff]
    %v601 = vld [vmem:[#allocation8 + $0x58] sm:$0xff]
    %v602 = vld [vmem:[#allocation8 + $0x60] sm:$0xff]
    %v603 = vld [vmem:[#allocation8 + $0x68] sm:$0xff]
    %v604 = vld [vmem:[#allocation8 + $0x70] sm:$0xff]
    %v605 = vld [vmem:[#allocation8 + $0x78] sm:$0xff]
    %v606 = vld [vmem:[#allocation8 + $0x80] sm:$0xff]
    %v607 = vld [vmem:[#allocation8 + $0x88] sm:$0xff]
    %v608 = vld [vmem:[#allocation8 + $0x90] sm:$0xff]
    %v609 = vld [vmem:[#allocation8 + $0x98] sm:$0xff]
    %v610 = vld [vmem:[#allocation8 + $0xa0] sm:$0xff]
    %v611 = vld [vmem:[#allocation8 + $0xa8] sm:$0xff]
    %v612 = vld [vmem:[#allocation8 + $0xb0] sm:$0xff]
    %v613 = vld [vmem:[#allocation8 + $0xb8] sm:$0xff]
    %v614 = vld [vmem:[#allocation8 + $0xc0] sm:$0xff]
    %v615 = vld [vmem:[#allocation8 + $0xc8] sm:$0xff]
    %v616 = vld [vmem:[#allocation8 + $0xd0] sm:$0xff]
    %v617 = vld [vmem:[#allocation8 + $0xd8] sm:$0xff]
    %v618 = vld [vmem:[#allocation8 + $0xe0] sm:$0xff]
    %v619 = vld [vmem:[#allocation8 + $0xe8] sm:$0xff]
    %v620 = vld [vmem:[#allocation8 + $0xf0] sm:$0xff]
    %v621 = vld [vmem:[#allocation8 + $0xf8] sm:$0xff]
    %v622 = vld [vmem:[#allocation8 + $0x100] sm:$0xff]
    %v623 = vld [vmem:[#allocation8 + $0x108] sm:$0xff]
    %v624 = vld [vmem:[#allocation8 + $0x110] sm:$0xff]
    %v625 = vld [vmem:[#allocation8 + $0x118] sm:$0xff]
    %v626 = vld [vmem:[#allocation8 + $0x120] sm:$0xff]
    %v627 = vld [vmem:[#allocation8 + $0x128] sm:$0xff]
    %v628 = vld [vmem:[#allocation8 + $0x130] sm:$0xff]
    %v629 = vld [vmem:[#allocation8 + $0x138] sm:$0xff]
    %v630 = vld [vmem:[#allocation8 + $0x140] sm:$0xff]
    %v631 = vld [vmem:[#allocation8 + $0x148] sm:$0xff]
    %v632 = vld [vmem:[#allocation8 + $0x150] sm:$0xff]
    %v633 = vld [vmem:[#allocation8 + $0x158] sm:$0xff]
    %v634 = vld [vmem:[#allocation8 + $0x160] sm:$0xff]
    %v635 = vld [vmem:[#allocation8 + $0x168] sm:$0xff]
    %v636 = vld [vmem:[#allocation8 + $0x170] sm:$0xff]
    %v637 = vld [vmem:[#allocation8 + $0x178] sm:$0xff]
    %v638 = vld [vmem:[#allocation8 + $0x180] sm:$0xff]
    %v639 = vld [vmem:[#allocation8 + $0x188] sm:$0xff]
    %v640 = vld [vmem:[#allocation8 + $0x190] sm:$0xff]
    %v641 = vld [vmem:[#allocation8 + $0x198] sm:$0xff]
    %v642 = vld [vmem:[#allocation8 + $0x1a0] sm:$0xff]
    %v643 = vld [vmem:[#allocation8 + $0x1a8] sm:$0xff]
    %v644 = vld [vmem:[#allocation8 + $0x1b0] sm:$0xff]
    %v645 = vld [vmem:[#allocation8 + $0x1b8] sm:$0xff]
    %v646 = vld [vmem:[#allocation8 + $0x1c0] sm:$0xff]
    %v647 = vld [vmem:[#allocation8 + $0x1c8] sm:$0xff]
    %v648 = vld [vmem:[#allocation8 + $0x1d0] sm:$0xff]
    %v649 = vld [vmem:[#allocation8 + $0x1d8] sm:$0xff]
    %v650 = vld [vmem:[#allocation8 + $0x1e0] sm:$0xff]
    %v651 = vld [vmem:[#allocation8 + $0x1e8] sm:$0xff]
    %v652 = vld [vmem:[#allocation8 + $0x1f0] sm:$0xff]
    %v653 = vld [vmem:[#allocation8 + $0x1f8] sm:$0xff]
    %v654 = vld [vmem:[#allocation8 + $0x200] sm:$0xff]
    %v655 = vld [vmem:[#allocation8 + $0x208] sm:$0xff]
    %v656 = vld [vmem:[#allocation8 + $0x210] sm:$0xff]
    %v657 = vld [vmem:[#allocation8 + $0x218] sm:$0xff]
    %v658 = vld [vmem:[#allocation8 + $0x220] sm:$0xff]
    %v659 = vld [vmem:[#allocation8 + $0x228] sm:$0xff]
    %v660 = vld [vmem:[#allocation8 + $0x230] sm:$0xff]
    %v661 = vld [vmem:[#allocation8 + $0x238] sm:$0xff]
    %v662 = vld [vmem:[#allocation8 + $0x240] sm:$0xff]
    %v663 = vld [vmem:[#allocation8 + $0x248] sm:$0xff]
    %v664 = vld [vmem:[#allocation8 + $0x250] sm:$0xff]
    %v665 = vld [vmem:[#allocation8 + $0x258] sm:$0xff]
    %v666 = vld [vmem:[#allocation8 + $0x260] sm:$0xff]
    %v667 = vld [vmem:[#allocation8 + $0x268] sm:$0xff]
    %v668 = vld [vmem:[#allocation8 + $0x270] sm:$0xff]
    %v669 = vld [vmem:[#allocation8 + $0x278] sm:$0xff]
    %v670 = vld [vmem:[#allocation8 + $0x280] sm:$0xff]
    %v671 = vld [vmem:[#allocation8 + $0x288] sm:$0xff]
    %v672 = vld [vmem:[#allocation8 + $0x290] sm:$0xff]
    %v673 = vld [vmem:[#allocation8 + $0x298] sm:$0xff]
    %v674 = vld [vmem:[#allocation8 + $0x2a0] sm:$0xff]
    %v675 = vld [vmem:[#allocation8 + $0x2a8] sm:$0xff]
    %v676 = vld [vmem:[#allocation8 + $0x2b0] sm:$0xff]
    %v677 = vld [vmem:[#allocation8 + $0x2b8] sm:$0xff]
    %v678 = vld [vmem:[#allocation8 + $0x2c0] sm:$0xff]
    %v679 = vld [vmem:[#allocation8 + $0x2c8] sm:$0xff]
    %v680 = vld [vmem:[#allocation8 + $0x2d0] sm:$0xff]
    %v681 = vld [vmem:[#allocation8 + $0x2d8] sm:$0xff]
    %v682 = vld [vmem:[#allocation8 + $0x2e0] sm:$0xff]
    %v683 = vld [vmem:[#allocation8 + $0x2e8] sm:$0xff]
    %v684 = vld [vmem:[#allocation8 + $0x2f0] sm:$0xff]
    %v685 = vld [vmem:[#allocation8 + $0x2f8] sm:$0xff]
    %v686 = vld [vmem:[#allocation8 + $0x300] sm:$0xff]
    %v687 = vld [vmem:[#allocation8 + $0x308] sm:$0xff]
    %v688 = vld [vmem:[#allocation8 + $0x310] sm:$0xff]
    %v689 = vld [vmem:[#allocation8 + $0x318] sm:$0xff]
    %v690 = vld [vmem:[#allocation8 + $0x320] sm:$0xff]
    %v691 = vld [vmem:[#allocation8 + $0x328] sm:$0xff]
    %v692 = vld [vmem:[#allocation8 + $0x330] sm:$0xff]
    %v693 = vld [vmem:[#allocation8 + $0x338] sm:$0xff]
    %v694 = vld [vmem:[#allocation8 + $0x340] sm:$0xff]
    %v695 = vld [vmem:[#allocation8 + $0x348] sm:$0xff]
    %v696 = vld [vmem:[#allocation8 + $0x350] sm:$0xff]
    %v697 = vld [vmem:[#allocation8 + $0x358] sm:$0xff]
    %v698 = vld [vmem:[#allocation8 + $0x360] sm:$0xff]
    %v699 = vld [vmem:[#allocation8 + $0x368] sm:$0xff]
    %v700 = vld [vmem:[#allocation8 + $0x370] sm:$0xff]
    %v701 = vld [vmem:[#allocation8 + $0x378] sm:$0xff]
    %v702 = vld [vmem:[#allocation8 + $0x380] sm:$0xff]
    %v703 = vld [vmem:[#allocation8 + $0x388] sm:$0xff]
    %v704 = vld [vmem:[#allocation8 + $0x390] sm:$0xff]
    %v705 = vld [vmem:[#allocation8 + $0x398] sm:$0xff]
    %v706 = vld [vmem:[#allocation8 + $0x3a0] sm:$0xff]
    %v707 = vld [vmem:[#allocation8 + $0x3a8] sm:$0xff]
    %v708 = vld [vmem:[#allocation8 + $0x3b0] sm:$0xff]
    %v709 = vld [vmem:[#allocation8 + $0x3b8] sm:$0xff]
    %v710 = vld [vmem:[#allocation8 + $0x3c0] sm:$0xff]
    %v711 = vld [vmem:[#allocation8 + $0x3c8] sm:$0xff]
    %v712 = vld [vmem:[#allocation8 + $0x3d0] sm:$0xff]
    %v713 = vld [vmem:[#allocation8 + $0x3d8] sm:$0xff]
    %v714 = vld [vmem:[#allocation8 + $0x3e0] sm:$0xff]
    %v715 = vld [vmem:[#allocation8 + $0x3e8] sm:$0xff]
    %v716 = vld [vmem:[#allocation8 + $0x3f0] sm:$0xff]
    %v717 = vld [vmem:[#allocation8 + $0x3f8] sm:$0xff]
    %v718 = vld [vmem:[%s8] sm:$0xf]
    %v720 = vlaneseq
    %v721 = vshrl.u32 %v720, 7
    %v722 = vsub.s32 0, %v721
    %v723 = vrot.slane %v718, %v722
    %v724 = vlaneseq
    %v725 = vshrl.u32 %v724, 7
    %v726 = vsub.s32 1, %v725
    %v727 = vrot.slane %v718, %v726
    %v728 = vlaneseq
    %v729 = vshrl.u32 %v728, 7
    %v730 = vsub.s32 2, %v729
    %v731 = vrot.slane %v718, %v730
    %v732 = vlaneseq
    %v733 = vshrl.u32 %v732, 7
    %v734 = vsub.s32 3, %v733
    %v735 = vrot.slane %v718, %v734
    %740 = vmatprep.subr.mxu0 %v591
    %741 = vmatpush1.msra.mxu0 %v590
    %742 = vmatprep.subr.mxu0 %v595
    %743 = vmatpush1.msra.mxu0 %v594
    %744 = vmatprep.subr.mxu0 %v599
    %745 = vmatpush1.msra.mxu0 %v598
    %746 = vmatprep.subr.mxu0 %v603
    %747 = vmatpush1.msra.mxu0 %v602
    %748 = vmatprep.subr.mxu0 %v607
    %749 = vmatpush1.msra.mxu0 %v606
    %750 = vmatprep.subr.mxu0 %v611
    %751 = vmatpush1.msra.mxu0 %v610
    %752 = vmatprep.subr.mxu0 %v615
    %753 = vmatpush1.msra.mxu0 %v614
    %754 = vmatprep.subr.mxu0 %v619
    %755 = vmatpush1.msra.mxu0 %v618
    %756 = vmatprep.subr.mxu0 %v623
    %757 = vmatpush1.msra.mxu0 %v622
    %758 = vmatprep.subr.mxu0 %v627
    %759 = vmatpush1.msra.mxu0 %v626
    %760 = vmatprep.subr.mxu0 %v631
    %761 = vmatpush1.msra.mxu0 %v630
    %762 = vmatprep.subr.mxu0 %v635
    %763 = vmatpush1.msra.mxu0 %v634
    %764 = vmatprep.subr.mxu0 %v639
    %765 = vmatpush1.msra.mxu0 %v638
    %766 = vmatprep.subr.mxu0 %v643
    %767 = vmatpush1.msra.mxu0 %v642
    %768 = vmatprep.subr.mxu0 %v647
    %769 = vmatpush1.msra.mxu0 %v646
    %770 = vmatprep.subr.mxu0 %v651
    %771 = vmatpush1.msra.mxu0 %v650
    %772 = vmatprep.subr.mxu0 %v655
    %773 = vmatpush1.msra.mxu0 %v654
    %774 = vmatprep.subr.mxu0 %v659
    %775 = vmatpush1.msra.mxu0 %v658
    %776 = vmatprep.subr.mxu0 %v663
    %777 = vmatpush1.msra.mxu0 %v662
    %778 = vmatprep.subr.mxu0 %v667
    %779 = vmatpush1.msra.mxu0 %v666
    %780 = vmatprep.subr.mxu0 %v671
    %781 = vmatpush1.msra.mxu0 %v670
    %782 = vmatprep.subr.mxu0 %v675
    %783 = vmatpush1.msra.mxu0 %v674
    %784 = vmatprep.subr.mxu0 %v679
    %785 = vmatpush1.msra.mxu0 %v678
    %786 = vmatprep.subr.mxu0 %v683
    %787 = vmatpush1.msra.mxu0 %v682
    %788 = vmatprep.subr.mxu0 %v687
    %789 = vmatpush1.msra.mxu0 %v686
    %790 = vmatprep.subr.mxu0 %v691
    %791 = vmatpush1.msra.mxu0 %v690
    %792 = vmatprep.subr.mxu0 %v695
    %793 = vmatpush1.msra.mxu0 %v694
    %794 = vmatprep.subr.mxu0 %v699
    %795 = vmatpush1.msra.mxu0 %v698
    %796 = vmatprep.subr.mxu0 %v703
    %797 = vmatpush1.msra.mxu0 %v702
    %798 = vmatprep.subr.mxu0 %v707
    %799 = vmatpush1.msra.mxu0 %v706
    %800 = vmatprep.subr.mxu0 %v711
    %801 = vmatpush1.msra.mxu0 %v710
    %802 = vmatprep.subr.mxu0 %v715
    %803 = vmatpush1.msra.mxu0 %v714
    %804 = vmatprep.mubr.f32.mxu0 %v589
    %805 = vmatmul.mubr.f32.gmra.mrb[0].mxu0 %v588
    %v806 = vpop.f32.mrb[0].mxu0
    %v807 = vadd.f32 %v723, %v806
    %v808 = vpop.f32.mrb[0].mxu0
    %v809 = vadd.f32 %v727, %v808
    %810 = vdwg.mxu0
    %811 = vmatprep.subr.mxu0 %v593
    %812 = vmatpush1.msra.mxu0 %v592
    %813 = vmatprep.subr.mxu0 %v597
    %814 = vmatpush1.msra.mxu0 %v596
    %815 = vmatprep.subr.mxu0 %v601
    %816 = vmatpush1.msra.mxu0 %v600
    %817 = vmatprep.subr.mxu0 %v605
    %818 = vmatpush1.msra.mxu0 %v604
    %819 = vmatprep.subr.mxu0 %v609
    %820 = vmatpush1.msra.mxu0 %v608
    %821 = vmatprep.subr.mxu0 %v613
    %822 = vmatpush1.msra.mxu0 %v612
    %823 = vmatprep.subr.mxu0 %v617
    %824 = vmatpush1.msra.mxu0 %v616
    %825 = vmatprep.subr.mxu0 %v621
    %826 = vmatpush1.msra.mxu0 %v620
    %827 = vmatprep.subr.mxu0 %v625
    %828 = vmatpush1.msra.mxu0 %v624
    %829 = vmatprep.subr.mxu0 %v629
    %830 = vmatpush1.msra.mxu0 %v628
    %831 = vmatprep.subr.mxu0 %v633
    %832 = vmatpush1.msra.mxu0 %v632
    %833 = vmatprep.subr.mxu0 %v637
    %834 = vmatpush1.msra.mxu0 %v636
    %835 = vmatprep.subr.mxu0 %v641
    %836 = vmatpush1.msra.mxu0 %v640
    %837 = vmatprep.subr.mxu0 %v645
    %838 = vmatpush1.msra.mxu0 %v644
    %839 = vmatprep.subr.mxu0 %v649
    %840 = vmatpush1.msra.mxu0 %v648
    %841 = vmatprep.subr.mxu0 %v653
    %842 = vmatpush1.msra.mxu0 %v652
    %843 = vmatprep.subr.mxu0 %v657
    %844 = vmatpush1.msra.mxu0 %v656
    %845 = vmatprep.subr.mxu0 %v661
    %846 = vmatpush1.msra.mxu0 %v660
    %847 = vmatprep.subr.mxu0 %v665
    %848 = vmatpush1.msra.mxu0 %v664
    %849 = vmatprep.subr.mxu0 %v669
    %850 = vmatpush1.msra.mxu0 %v668
    %851 = vmatprep.subr.mxu0 %v673
    %852 = vmatpush1.msra.mxu0 %v672
    %853 = vmatprep.subr.mxu0 %v677
    %854 = vmatpush1.msra.mxu0 %v676
    %855 = vmatprep.subr.mxu0 %v681
    %856 = vmatpush1.msra.mxu0 %v680
    %857 = vmatprep.subr.mxu0 %v685
    %858 = vmatpush1.msra.mxu0 %v684
    %859 = vmatprep.subr.mxu0 %v689
    %860 = vmatpush1.msra.mxu0 %v688
    %861 = vmatprep.subr.mxu0 %v693
    %862 = vmatpush1.msra.mxu0 %v692
    %863 = vmatprep.subr.mxu0 %v697
    %864 = vmatpush1.msra.mxu0 %v696
    %865 = vmatprep.subr.mxu0 %v701
    %866 = vmatpush1.msra.mxu0 %v700
    %867 = vmatprep.subr.mxu0 %v705
    %868 = vmatpush1.msra.mxu0 %v704
    %869 = vmatprep.subr.mxu0 %v709
    %870 = vmatpush1.msra.mxu0 %v708
    %871 = vmatprep.subr.mxu0 %v713
    %872 = vmatpush1.msra.mxu0 %v712
    %873 = vmatprep.subr.mxu0 %v717
    %874 = vmatpush1.msra.mxu0 %v716
    %875 = vmatprep.mubr.f32.mxu0 %v589
    %876 = vmatmul.mubr.f32.gmra.mrb[0].mxu0 %v588
    %v877 = vpop.f32.mrb[0].mxu0
    %v878 = vadd.f32 %v731, %v877
    %v879 = vpop.f32.mrb[0].mxu0
    %v880 = vadd.f32 %v735, %v879
    %881 = vdwg.mxu0
    %v882 = vmax.f32 %v807, 0.0
    %v883 = vmax.f32 %v809, 0.0
    %v884 = vmax.f32 %v878, 0.0
    %v885 = vmax.f32 %v880, 0.0
    %v890 = vcombine.low %v882, %v883
    %v891 = vcombine.high %v882, %v883
    %v892 = vcombine.low %v884, %v885
    %v893 = vcombine.high %v884, %v885
    %v895 = vunpack.c.l.s4 1983009808
    %v896 = vunpack.c.0.s8 %v895
    %v897 = vlaneseq
    %v898 = vshrl.u32 %v897, 7
    %v899 = vsub.s32 %v896, %v898
    %v900 = vrot.slane %v890, %v899
    %v902 = vunpack.c.l.s4 1983009808
    %v903 = vunpack.c.0.s8 %v902
    %v904 = vlaneseq
    %v905 = vshrl.u32 %v904, 7
    %v906 = vsub.s32 %v903, %v905
    %v907 = vrot.slane %v891, %v906
    %v909 = vunpack.c.l.s4 1983009808
    %v910 = vunpack.c.0.s8 %v909
    %v911 = vlaneseq
    %v912 = vshrl.u32 %v911, 7
    %v913 = vsub.s32 %v910, %v912
    %v914 = vrot.slane %v892, %v913
    %v916 = vunpack.c.l.s4 1983009808
    %v917 = vunpack.c.0.s8 %v916
    %v918 = vlaneseq
    %v919 = vshrl.u32 %v918, 7
    %v920 = vsub.s32 %v917, %v919
    %v921 = vrot.slane %v893, %v920
    %v922 = vcombine.low %v900, %v914
    %v923 = vcombine.high %v900, %v914
    %v924 = vcombine.low %v907, %v921
    %v925 = vcombine.high %v907, %v921
    %930 = vst [vmem:[#allocation10] sm:$0xff] %v922
    %931 = vst [vmem:[#allocation10 + $0x8] sm:$0xff] %v923
    %932 = vst [vmem:[#allocation10 + $0x10] sm:$0xff] %v924
    %933 = vst [vmem:[#allocation10 + $0x18] sm:$0xff] %v925
    // Predicated region
    $region54: #{tpu_custom_call.1} parent=1 // pred_check
      _
    $region55: #{tpu_custom_call.1} parent=1 // pred_check_branch
      %935 = sbr.rel (0) target = $region57
    $region56: #{tpu_custom_call.1} parent=1 // pred_region
      %s937 = ssub.s32 512, 128
      %938 = vsyncadd [#allocation4], %s937
      %s939 = sshll.u32 [#allocation10], 4
      %s940 = int_to_ptr.vmem [resolvable:$true] %s939
      %945 = dma.vmem_to_hbm [thread:$0]  %s940, 128, %s9, [#allocation4], 128, 128, 8
    $region57: #{tpu_custom_call.1} parent=1 // pred_fallthru
      _
    // Predicated region
    $region58: #{tpu_custom_call.1} parent=1 // pred_check
      _
    $region59: #{tpu_custom_call.1} parent=1 // pred_check_branch
      %947 = sbr.rel (0) target = $region61
    $region60: #{tpu_custom_call.1} parent=1 // pred_region
      %948 = dma.done [#allocation4], 512
    $region61: #{tpu_custom_call.1} parent=1 // pred_fallthru
      _
    %949 = vsyncpa [#allocation3], 1
    %950 = vsyncpa [#allocation6], 1
    %951 = vsyncpa [#allocation9], 1
    %952 = vsyncpa [#allocation4], 1

</llo_original>
